<compile_context>
chip_gen: v7x
topology: tpu7x:2x2x1
jax: 0.10.0
libtpu: 0.0.40
codegen_flags: <defaults>
</compile_context>

<pallas_src>
import functools

import jax
import jax.numpy as jnp
from jax.experimental import pallas as pl
from jax.experimental.pallas import tpu as pltpu


def _ada_rms_norm_kernel(x_ref, scale_ref, o_ref, *, eps):
    # x_ref:     (TS, D)  one sequence tile of one batch element
    # scale_ref: (1, D)   precomputed (cond @ W^T + 1) for this batch, fp32
    # o_ref:     (TS, D)
    x = x_ref[...]
    scale_row = scale_ref[...]                               # (1, D) fp32

    # RMS statistics over the feature (lane) axis, in fp32.
    xf = x.astype(jnp.float32)
    mean_sq = jnp.mean(xf * xf, axis=-1, keepdims=True)      # (TS, 1)
    inv_rms = jax.lax.rsqrt(mean_sq + eps)                   # (TS, 1)

    s = scale_row * inv_rms                                  # (TS, D) fp32
    # Match torch exactly: x * scale.to(x.dtype)
    o_ref[...] = (x * s.astype(x.dtype)).astype(o_ref.dtype)


def _choose_seq_tile(S, D, itemsize):
    """~2 MiB sequence tiles (HBM-bound sweet spot), multiple of 8 sublanes."""
    target_bytes = 2 * 1024 * 1024
    ts = max(8, (target_bytes // max(1, D * itemsize)) // 8 * 8)
    ts = min(ts, 1024)
    s_up = pl.cdiv(S, 8) * 8
    return min(ts, s_up)


def ada_rms_norm(x, cond, weight, eps=1e-6):
    """AdaRMSNorm forward.

    x:      [B, S, D]
    cond:   [B, C]
    weight: [D, C]   (PyTorch nn.Linear layout, no bias, zero-init in module)
    """
    B, S, D = x.shape
    C = cond.shape[-1]
    assert weight.shape == (D, C)

    # Hoisted conditioning scale: cond @ W^T + 1  -> [B, 1, D], fp32.
    scale = cond.astype(jnp.float32) @ weight.T.astype(jnp.float32) + 1.0
    scale = scale.reshape(B, 1, D)

    # Tile the sequence axis; pad S so it divides evenly. Padded rows are zero
    # -> finite outputs that are sliced away (per-row mean stays within a tile
    # because D is never split).
    TS = _choose_seq_tile(S, D, x.dtype.itemsize)
    S_pad = pl.cdiv(S, TS) * TS
    x_p = x if S_pad == S else jnp.pad(x, ((0, 0), (0, S_pad - S), (0, 0)))

    kernel = functools.partial(_ada_rms_norm_kernel, eps=eps)

    out = pl.pallas_call(
        kernel,
        out_shape=jax.ShapeDtypeStruct((B, S_pad, D), x.dtype),
        grid_spec=pltpu.PrefetchScalarGridSpec(
            num_scalar_prefetch=0,
            grid=(B, S_pad // TS),
            in_specs=[
                # x sequence tile: (TS, D), lane-dense in D.
                pl.BlockSpec((pl.Squeezed(), TS, D), lambda b, s: (b, s, 0)),
                # per-batch scale row: (1, D), reused across all S tiles.
                pl.BlockSpec((pl.Squeezed(), 1, D), lambda b, s: (b, 0, 0)),
            ],
            out_specs=pl.BlockSpec((pl.Squeezed(), TS, D), lambda b, s: (b, s, 0)),
        ),
        compiler_params=pltpu.CompilerParams(
            dimension_semantics=("parallel", "parallel"),
            vmem_limit_bytes=32 * 1024 * 1024,
        ),
    )(x_p, scale)

    return out if S_pad == S else out[:, :S, :]


def ada_rms_norm_ref(x, cond, weight, eps=1e-6):
    """Pure-JAX reference mirroring the PyTorch module."""
    scale = (cond @ weight.T)[:, None, :] + 1.0             # [B, 1, D]
    xf = x.astype(jnp.float32)
    mean_sq = jnp.mean(xf * xf, axis=-1, keepdims=True)     # [B, S, 1]
    s = scale.astype(jnp.float32) * jax.lax.rsqrt(mean_sq + eps)
    return x * s.astype(x.dtype)


if __name__ == "__main__":
    B, S, D, C = 2, 8, 32, 16
    eps = 1e-6

    key = jax.random.PRNGKey(0)
    kx, kc, kw = jax.random.split(key, 3)
    x = jax.random.normal(kx, (B, S, D), dtype=jnp.float32)
    cond = jax.random.normal(kc, (B, C), dtype=jnp.float32)
    # Module zero-inits the Linear; use small nonzero weights so the
    # conditioning path is actually exercised (synthetic).
    weight = 0.01 * jax.random.normal(kw, (D, C), dtype=jnp.float32)

    out = ada_rms_norm(x, cond, weight, eps=eps)
    out = jax.block_until_ready(out)

    ref = ada_rms_norm_ref(x, cond, weight, eps=eps)
    assert out.shape == (B, S, D)
    assert jnp.allclose(out, ref, rtol=1e-5, atol=1e-5), "mismatch vs reference"

    print("KERNEL_OK")
</pallas_src>

<mosaic_0001>
module attributes {stable_mosaic.version = 11 : i64} {
  func.func @_ada_rms_norm_kernel(%arg0: i32, %arg1: i32, %arg2: memref<1x8x32xf32, #tpu.memory_space<vmem>>, %arg3: memref<1x1x32xf32, #tpu.memory_space<vmem>>, %arg4: memref<1x8x32xf32, #tpu.memory_space<vmem>>) attributes {dimension_semantics = [#tpu.dimension_semantics<parallel>, #tpu.dimension_semantics<parallel>], iteration_bounds = array<i64: 2, 1>, scalar_prefetch = 0 : i64, scratch_operands = 0 : i64, tpu.core_type = #tpu.core_type<tc>, window_params = [{transform_indices = @transform_0, window_bounds = array<i64: 1, 8, 32>}, {transform_indices = @transform_1, window_bounds = array<i64: 1, 1, 32>}, {transform_indices = @transform_2, window_bounds = array<i64: 1, 8, 32>}]} {
    %c0 = arith.constant 0 : index
    %c0_0 = arith.constant 0 : index
    %c0_1 = arith.constant 0 : index
    %0 = vector.load %arg2[%c0, %c0_0, %c0_1] : memref<1x8x32xf32, #tpu.memory_space<vmem>>, vector<1x8x32xf32>
    %1 = vector.shape_cast %0 : vector<1x8x32xf32> to vector<8x32xf32>
    %c0_2 = arith.constant 0 : index
    %c0_3 = arith.constant 0 : index
    %c0_4 = arith.constant 0 : index
    %2 = vector.load %arg3[%c0_2, %c0_3, %c0_4] : memref<1x1x32xf32, #tpu.memory_space<vmem>>, vector<1x1x32xf32>
    %3 = vector.shape_cast %2 : vector<1x1x32xf32> to vector<1x32xf32>
    %4 = arith.mulf %1, %1 : vector<8x32xf32>
    %cst = arith.constant dense<0.000000e+00> : vector<8xf32>
    %5 = vector.multi_reduction <add>, %4, %cst [1] : vector<8x32xf32> to vector<8xf32>
    %6 = vector.shape_cast %5 : vector<8xf32> to vector<8x1xf32>
    %cst_5 = arith.constant 3.200000e+01 : f32
    %7 = vector.broadcast %cst_5 : f32 to vector<8x1xf32>
    %8 = arith.divf %6, %7 : vector<8x1xf32>
    %cst_6 = arith.constant 9.99999997E-7 : f32
    %9 = vector.broadcast %cst_6 : f32 to vector<8x1xf32>
    %10 = arith.addf %8, %9 : vector<8x1xf32>
    %11 = math.rsqrt %10 : vector<8x1xf32>
    %12 = vector.broadcast %3 : vector<1x32xf32> to vector<8x32xf32>
    %13 = vector.broadcast %11 : vector<8x1xf32> to vector<8x32xf32>
    %14 = arith.mulf %12, %13 : vector<8x32xf32>
    %15 = arith.mulf %1, %14 : vector<8x32xf32>
    %c0_7 = arith.constant 0 : index
    %c0_8 = arith.constant 0 : index
    %c0_9 = arith.constant 0 : index
    %16 = vector.load %arg4[%c0_7, %c0_8, %c0_9] : memref<1x8x32xf32, #tpu.memory_space<vmem>>, vector<1x8x32xf32>
    %17 = vector.shape_cast %16 : vector<1x8x32xf32> to vector<8x32xf32>
    %18 = vector.shape_cast %15 : vector<8x32xf32> to vector<1x8x32xf32>
    tpu.vector_store %arg4[%c0_7, %c0_8, %c0_9], %18 {strides = array<i32>} : memref<1x8x32xf32, #tpu.memory_space<vmem>>, vector<1x8x32xf32>,
    return
  }
  func.func @transform_0(%arg0: i32, %arg1: i32) -> (i32, i32, i32) {
    %c0_i32 = arith.constant 0 : i32
    %c0_i32_0 = arith.constant 0 : i32
    return %arg0, %arg1, %c0_i32 : i32, i32, i32
  }
  func.func @transform_1(%arg0: i32, %arg1: i32) -> (i32, i32, i32) {
    %c0_i32 = arith.constant 0 : i32
    %c0_i32_0 = arith.constant 0 : i32
    %c0_i32_1 = arith.constant 0 : i32
    return %arg0, %c0_i32, %c0_i32_0 : i32, i32, i32
  }
  func.func @transform_2(%arg0: i32, %arg1: i32) -> (i32, i32, i32) {
    %c0_i32 = arith.constant 0 : i32
    %c0_i32_0 = arith.constant 0 : i32
    return %arg0, %arg1, %c0_i32 : i32, i32, i32
  }
}

</mosaic_0001>

<llo_original>
// kernel: tpu_custom_call.1
$region0: #{tpu_custom_call.1}
  #allocation0 [shape = 'u32[]', space=smem, size = 0x4, offset = 0x4, fixed_abs, tag = 'smem constant byte address 0x4 - core index']
  #allocation1 [shape = 'u32[144,128]{1,0:T(1,128)}', space=vmem, size = 0x12000, scoped, tag = 'internal scratch']
  %s0 = inlined_call_operand.hbm [shape: f32[2,8,32], index: 0, kind: input, shape index: {}]
  %s1 = inlined_call_operand.vmem [shape: f32[2,1,32], index: 1, kind: input, shape index: {}]
  %s2 = inlined_call_operand.hbm [shape: f32[2,8,32], index: 2, kind: output, shape index: {}]
  %s3 = sld [smem:[#allocation0]]
  $region45: #{tpu_custom_call.1} parent=0
    _
  %s5 = ssub.s32 1, %s3
  %s6 = scalar_select 0, %s5, %s3
  $region1: #{tpu_custom_call.1} parent=0
    #allocation2 [shape = 'u8[8192]{0}', space=vmem, size = 0x2000, scoped, tag = 'input window, operand 0']
    #allocation3 [shape = 's32[2]{0}', space=sflag, size = 0x8, scoped, tag = 'scoped memory for tpu_custom_call.1']
    #allocation4 [shape = 's32[2]{0}', space=sflag, size = 0x8, scoped, tag = 'scoped memory for tpu_custom_call.1']
    #allocation5 [shape = 'u8[8192]{0}', space=vmem, size = 0x2000, scoped, tag = 'output window, operand 0']
    %7 = vsyncpa [#allocation3], 0
    %s8 = scalar_lea.sflag [#allocation3], 1
    %9 = vsyncpa %s8, 0
    %10 = vsyncpa [#allocation4], 0
    %s11 = scalar_lea.sflag [#allocation4], 1
    %12 = vsyncpa %s11, 0
    loop: start=0, step=1, limit=4
    $region2: #{tpu_custom_call.1} parent=1 // loop_pre_header
      _
    $region3: #{tpu_custom_call.1} parent=1 // loop_header
      %s14 = sphi 0, %s18
      %p15 = scmp.ge.s32.totalorder %s14, 4
      %s21 = sphi 0, %s33
      %s22 = sphi 0, %s29
      %s23 = sphi 0, %s21
      %s24 = sphi 0, %s22
      %s25 = sphi 0, %s23
      %s26 = sphi 0, %s24
      %s38 = sphi 0, %s40
      %s41 = sphi 0, %s38
      %s42 = sphi 0, %s41
      %s58 = sphi 0, %s42
      %s64 = sphi 0, %s66
      %s67 = sphi 0, %s64
      %s68 = sphi 0, %s67
      %s84 = sphi 0, %s68
      %s92 = sphi 0, %s94
      %s95 = sphi 0, %s92
      %s96 = sphi 0, %s95
      %s112 = sphi 0, %s96
    $region4: #{tpu_custom_call.1} parent=1 // loop_header_branch
      %17 = sbr.rel (%p15) target = $region8
    $region5: #{tpu_custom_call.1} parent=1 // loop_body
      %s19 = ssub.s32 %s14, 1
      %s20 = ssub.s32 %s14, 2
      %s27 = sadd.s32 1, %s22
      %p28 = scmp.ge.s32.totalorder %s27, 1
      %s29 = scalar_select %p28, 0, %s27
      %s30 = sadd.s32 1, %s21
      %s31 = scalar_select %p28, %s30, %s21
      %p32 = scmp.ge.s32.totalorder %s31, 2
      %s33 = scalar_select %p32, 0, %s31
      %s34 = ssub.s32 %s21, %s33
      %s35 = ssub.s32 %s22, %s29
      %s36 = sor.u32 %s34, %s35
      %p37 = scmp.eq.s32.totalorder %s36, 0
      %s39 = sadd.s32 %s38, 1
      %s40 = scalar_select %p37, %s38, %s39
      %p43 = pneg %p37
      %p44 = scmp.eq.s32.totalorder %s14, 1
      %p45 = por %p43, %p44
      %p46 = scmp.ne.s32.totalorder %s38, %s41
      %p47 = scmp.eq.s32.totalorder %s14, 0
      %p48 = por %p46, %p47
      %p49 = scmp.ne.s32.totalorder %s38, %s41
      %p50 = scmp.eq.s32.totalorder %s19, 1
      %p51 = por %p49, %p50
      %p52 = scmp.ne.s32.totalorder %s41, %s42
      %p53 = scmp.eq.s32.totalorder %s19, 0
      %p54 = por %p52, %p53
      %p55 = scmp.ne.s32.totalorder %s41, %s42
      %p56 = scmp.eq.s32.totalorder %s20, 1
      %p57 = por %p55, %p56
      %p59 = scmp.ne.s32.totalorder %s42, %s58
      %p60 = scmp.eq.s32.totalorder %s20, 0
      %p61 = por %p59, %p60
      %s62 = ssub.s32 %s21, %s33
      %p63 = scmp.eq.s32.totalorder %s62, 0
      %s65 = sadd.s32 %s64, 1
      %s66 = scalar_select %p63, %s64, %s65
      %p69 = pneg %p63
      %p70 = scmp.eq.s32.totalorder %s14, 1
      %p71 = por %p69, %p70
      %p72 = scmp.ne.s32.totalorder %s64, %s67
      %p73 = scmp.eq.s32.totalorder %s14, 0
      %p74 = por %p72, %p73
      %p75 = scmp.ne.s32.totalorder %s64, %s67
      %p76 = scmp.eq.s32.totalorder %s19, 1
      %p77 = por %p75, %p76
      %p78 = scmp.ne.s32.totalorder %s67, %s68
      %p79 = scmp.eq.s32.totalorder %s19, 0
      %p80 = por %p78, %p79
      %p81 = scmp.ne.s32.totalorder %s67, %s68
      %p82 = scmp.eq.s32.totalorder %s20, 1
      %p83 = por %p81, %p82
      %p85 = scmp.ne.s32.totalorder %s68, %s84
      %p86 = scmp.eq.s32.totalorder %s20, 0
      %p87 = por %p85, %p86
      %s88 = ssub.s32 %s21, %s33
      %s89 = ssub.s32 %s22, %s29
      %s90 = sor.u32 %s88, %s89
      %p91 = scmp.eq.s32.totalorder %s90, 0
      %s93 = sadd.s32 %s92, 1
      %s94 = scalar_select %p91, %s92, %s93
      %p97 = pneg %p91
      %p98 = scmp.eq.s32.totalorder %s14, 1
      %p99 = por %p97, %p98
      %p100 = scmp.ne.s32.totalorder %s92, %s95
      %p101 = scmp.eq.s32.totalorder %s14, 0
      %p102 = por %p100, %p101
      %p103 = scmp.ne.s32.totalorder %s92, %s95
      %p104 = scmp.eq.s32.totalorder %s19, 1
      %p105 = por %p103, %p104
      %p106 = scmp.ne.s32.totalorder %s95, %s96
      %p107 = scmp.eq.s32.totalorder %s19, 0
      %p108 = por %p106, %p107
      %p109 = scmp.ne.s32.totalorder %s95, %s96
      %p110 = scmp.eq.s32.totalorder %s20, 1
      %p111 = por %p109, %p110
      %p113 = scmp.ne.s32.totalorder %s96, %s112
      %p114 = scmp.eq.s32.totalorder %s20, 0
      %p115 = por %p113, %p114
      %p116 = scmp.le.s32.totalorder 1, %s14
      %p117 = scmp.lt.s32.totalorder %s14, 3
      %p118 = pnand %p116, %p117
      %p119 = pneg %p118
      // Predicated region
      $region9: #{tpu_custom_call.1} parent=5 // pred_check
        _
      $region10: #{tpu_custom_call.1} parent=5 // pred_check_branch
        %121 = sbr.rel (%p118) target = $region12
      $region11: #{tpu_custom_call.1} parent=5 // pred_region
        %s122 = ssub.s32 %s14, 1
      $region12: #{tpu_custom_call.1} parent=5 // pred_fallthru
        _
      %p123 = scmp.lt.s32.totalorder %s14, 2
      // Predicated region
      $region13: #{tpu_custom_call.1} parent=5 // pred_check
        %p124 = pneg %p123
      $region14: #{tpu_custom_call.1} parent=5 // pred_check_branch
        %126 = sbr.rel (%p124) target = $region16
      $region15: #{tpu_custom_call.1} parent=5 // pred_region
        // Predicated region
        $region17: #{tpu_custom_call.1} parent=15 // pred_check
          %p127 = pneg %p48
        $region18: #{tpu_custom_call.1} parent=15 // pred_check_branch
          %129 = sbr.rel (%p127) target = $region20
        $region19: #{tpu_custom_call.1} parent=15 // pred_region
          %s130 = sand.u32 %s38, 1
          %s131 = scalar_lea.sflag [#allocation3], %s130
          %s132 = sand.u32 %s38, 1
          %s133 = smul.addr %s132, 8
          %s134 = scalar_lea.vmem [#allocation2], %s133
          %s136 = ssub.s32 128, 128
          %137 = vsyncadd %s131, %s136
          %s138 = sadd.s32 %s22, %s21
          %s139 = smul.addr %s138, 128
          %s140 = scalar_lea.hbm %s0, %s139
          %s142 = sshll.u32 %s134, 4
          %s143 = int_to_ptr.vmem [resolvable:$true] %s142
          %145 = dma.hbm_to_vmem [thread:$0]  %s140, 128, %s143, %s131
        $region20: #{tpu_custom_call.1} parent=15 // pred_fallthru
          _
        // Predicated region
        $region21: #{tpu_custom_call.1} parent=15 // pred_check
          %p146 = pneg %p74
        $region22: #{tpu_custom_call.1} parent=15 // pred_check_branch
          %148 = sbr.rel (%p146) target = $region24
        $region23: #{tpu_custom_call.1} parent=15 // pred_region
          %p149 = scmp.lt.s32.totalorder %s21, 1
          %s150 = scalar_select %p149, %s21, 1
          %s151 = scalar_lea.vmem %s1, %s150
        $region24: #{tpu_custom_call.1} parent=15 // pred_fallthru
          _
      $region16: #{tpu_custom_call.1} parent=5 // pred_fallthru
        _
      %p152 = scmp.le.s32.totalorder 1, %s14
      %p153 = scmp.lt.s32.totalorder %s14, 3
      %p154 = pnand %p152, %p153
      %p155 = pneg %p154
      // Predicated region
      $region25: #{tpu_custom_call.1} parent=5 // pred_check
        _
      $region26: #{tpu_custom_call.1} parent=5 // pred_check_branch
        %157 = sbr.rel (%p154) target = $region28
      $region27: #{tpu_custom_call.1} parent=5 // pred_region
        %s158 = ssub.s32 %s14, 1
        %s159 = sand.u32 %s41, 1
        %s160 = scalar_lea.sflag [#allocation3], %s159
        %s161 = sand.u32 %s41, 1
        %s162 = smul.addr %s161, 8
        %s163 = scalar_lea.vmem [#allocation2], %s162
        // Predicated region
        $region29: #{tpu_custom_call.1} parent=27 // pred_check
          %p164 = pneg %p54
        $region30: #{tpu_custom_call.1} parent=27 // pred_check_branch
          %166 = sbr.rel (%p164) target = $region32
        $region31: #{tpu_custom_call.1} parent=27 // pred_region
          %167 = dma.done %s160, 128
        $region32: #{tpu_custom_call.1} parent=27 // pred_fallthru
          _
        %s168 = sand.u32 %s41, 1
        %s169 = scalar_lea.sflag [#allocation3], %s168
        %s170 = sand.u32 %s41, 1
        %s171 = smul.addr %s170, 8
        %s172 = scalar_lea.vmem [#allocation2], %s171
        %p173 = pneg %p54
        %p174 = pneg %p51
        %p175 = scmp.lt.s32.totalorder %s23, 1
        %s176 = scalar_select %p175, %s23, 1
        %s177 = scalar_lea.vmem %s1, %s176
        %p178 = pneg %p80
        %p179 = pneg %p77
        %p180 = pneg %p108
        %p181 = pneg %p105
        %s182 = sand.u32 %s95, 1
        %s183 = scalar_lea.sflag [#allocation4], %s182
        %s184 = sand.u32 %s95, 1
        %s185 = smul.addr %s184, 8
        %s186 = scalar_lea.vmem [#allocation5], %s185
        %p187 = scmp.lt.s32.totalorder %s23, 1
        %s188 = scalar_select %p187, %s23, 1
        %s189 = scalar_lea.vmem %s1, %s188
        %v190 = vld [vmem:[%s163] sm:$0xff]
        %v191 = vld [vmem:[%s189] sm:$0x1]
        %v192 = vmul.f32 %v190, %v190
        %vm193 = vcmask 261120
        %v194 = vsel %vm193, %v192, 0.0
        %195 = vadd.xlane.f32.xlu0 %v194
        %v196 = vpop.xlane.xlu0 %195
        %v197 = vrcp.pop 32.0
        %v198 = vmul.f32 %v196, %v197
        %v199 = vadd.f32 %v198, 1e-06
        %v200 = vrsqrt.pop %v199
        %v202 = vlaneseq
        %v203 = vshrl.u32 %v202, 7
        %v204 = vsub.s32 0, %v203
        %v205 = vrot.slane %v191, %v204
        %v207 = vmul.f32 %v205, %v200
        %v208 = vmul.f32 %v190, %v207
        %209 = vst.msk [vmem:[%s186] sm:$0xff] %vm193, %v208
        %s210 = sand.u32 %s95, 1
        %s211 = scalar_lea.sflag [#allocation4], %s210
        %s212 = sand.u32 %s95, 1
        %s213 = smul.addr %s212, 8
        %s214 = scalar_lea.vmem [#allocation5], %s213
        // Predicated region
        $region33: #{tpu_custom_call.1} parent=27 // pred_check
          %p215 = pneg %p105
        $region34: #{tpu_custom_call.1} parent=27 // pred_check_branch
          %217 = sbr.rel (%p215) target = $region36
        $region35: #{tpu_custom_call.1} parent=27 // pred_region
          %s219 = ssub.s32 128, 128
          %220 = vsyncadd %s211, %s219
          %s221 = sadd.s32 %s24, %s23
          %s222 = smul.addr %s221, 128
          %s223 = scalar_lea.hbm %s2, %s222
          %s225 = sshll.u32 %s214, 4
          %s226 = int_to_ptr.vmem [resolvable:$true] %s225
          %228 = dma.vmem_to_hbm [thread:$0]  %s226, 128, %s223, %s211
        $region36: #{tpu_custom_call.1} parent=27 // pred_fallthru
          _
      $region28: #{tpu_custom_call.1} parent=5 // pred_fallthru
        _
      %p229 = scmp.le.s32.totalorder 2, %s14
      // Predicated region
      $region37: #{tpu_custom_call.1} parent=5 // pred_check
        %p230 = pneg %p229
      $region38: #{tpu_custom_call.1} parent=5 // pred_check_branch
        %232 = sbr.rel (%p230) target = $region40
      $region39: #{tpu_custom_call.1} parent=5 // pred_region
        %s233 = ssub.s32 %s14, 2
        // Predicated region
        $region41: #{tpu_custom_call.1} parent=39 // pred_check
          %p234 = pneg %p111
        $region42: #{tpu_custom_call.1} parent=39 // pred_check_branch
          %236 = sbr.rel (%p234) target = $region44
        $region43: #{tpu_custom_call.1} parent=39 // pred_region
          %s237 = sand.u32 %s96, 1
          %s238 = scalar_lea.sflag [#allocation4], %s237
          %s239 = sand.u32 %s96, 1
          %s240 = smul.addr %s239, 8
          %s241 = scalar_lea.vmem [#allocation5], %s240
          %242 = dma.done %s238, 128
        $region44: #{tpu_custom_call.1} parent=39 // pred_fallthru
          _
      $region40: #{tpu_custom_call.1} parent=5 // pred_fallthru
        _
    $region6: #{tpu_custom_call.1} parent=1 // loop_footer
      %s18 = sadd.s32 1, %s14
    $region7: #{tpu_custom_call.1} parent=1 // loop_footer_branch
      %13 = sbr.rel target = $region3
    $region8: #{tpu_custom_call.1} parent=1 // loop_exit
      _
    %243 = vsyncpa [#allocation3], 1
    %s244 = scalar_lea.sflag [#allocation3], 1
    %245 = vsyncpa %s244, 1
    %246 = vsyncpa [#allocation4], 1
    %s247 = scalar_lea.sflag [#allocation4], 1
    %248 = vsyncpa %s247, 1

</llo_original>
